<compile_context>
chip_gen: v7x
topology: tpu7x:2x2x1
jax: 0.10.0
libtpu: 0.0.40
codegen_flags: <defaults>
</compile_context>

<pallas_src>
import functools

import jax
import jax.numpy as jnp
from jax import lax
from jax.experimental import pallas as pl
from jax.experimental.pallas import tpu as pltpu


# ----------------------------- glue: align_corners=True bilinear -------------
def _interp_matrix(out_size, in_size):
    """Dense (out_size, in_size) interpolation matrix, align_corners=True."""
    idx = jnp.arange(out_size, dtype=jnp.float32)
    if out_size > 1:
        coords = idx * ((in_size - 1) / (out_size - 1))
    else:
        coords = jnp.zeros_like(idx)
    lo = jnp.clip(jnp.floor(coords).astype(jnp.int32), 0, in_size - 1)
    hi = jnp.minimum(lo + 1, in_size - 1)
    frac = coords - lo.astype(jnp.float32)
    m = jnp.zeros((out_size, in_size), jnp.float32)
    rows = jnp.arange(out_size)
    m = m.at[rows, lo].add(1.0 - frac)
    m = m.at[rows, hi].add(frac)
    return m


def _upsample_bilinear_align_corners(gt, out_h, out_w):
    """torch.nn.UpsamplingBilinear2d((out_h, out_w)) on NCHW gt."""
    n, c, hin, win = gt.shape
    wh = _interp_matrix(out_h, hin)
    ww = _interp_matrix(out_w, win)
    g = gt.reshape(n * c, hin, win).astype(jnp.float32)
    up = jnp.einsum('oh,bhw,pw->bop', wh, g, ww)
    return up.reshape(n, c, out_h, out_w)
    # TODO(synk): optionally fold this (and a bf16 gt) into the kernel so the
    # full-resolution f32 gt map is never materialized in HBM (~1-2% traffic).


# ----------------------------- tiling plan ------------------------------------
def _cdiv(a, b):
    return -(-a // b)


def _plan_tiles(hw, max_tile_px, n_parallel):
    """Pick (tile_pixels, parallel_chunks, reduction_steps, padded_pixels).

    tile_pixels is a multiple of 1024 (= 8 sublanes x 128 lanes) so the packed
    (8, tile_pixels//8) elementwise path is lane- and sublane-dense.  Prefers a
    padding-free tiling when one exists; otherwise pads to the tile grid (the
    padded pixels are masked in-kernel).
    """
    max_tile_px = max(1024, (max_tile_px // 1024) * 1024)
    # Second "parallel" axis only when each chunk still gets a decent tile.
    p = n_parallel if (n_parallel > 1 and hw >= n_parallel * 4096) else 1

    thw = None
    n_tiles = 0
    if hw % 1024 == 0:
        t = min(max_tile_px, (hw // 1024) * 1024)
        while t >= 1024:
            if hw % t == 0 and (hw // t) % p == 0:
                thw = t
                n_tiles = hw // t
                break
            t -= 1024
    if thw is None:
        n_tiles = p * _cdiv(_cdiv(hw, max_tile_px), p)
        thw = min(max_tile_px, 1024 * _cdiv(_cdiv(hw, n_tiles), 1024))
        n_tiles = p * _cdiv(_cdiv(hw, thw), p)
    return thw, p, n_tiles // p, n_tiles * thw


# ----------------------------- Pallas kernel ----------------------------------
def _salience_mse_kernel(x_ref, gt_ref, w_ref, b_ref, o_ref, acc_ref, y_ref, *,
                         hw, thw, t_lanes, k_steps, padded, mxu_dtype):
    # grid = (N, P, K); axes 0/1 "parallel" (batch, pixel chunk), axis 2 is the
    # reduction over pixel tiles of the chunk.  Per-(n,p) partials land in o_ref.
    k = pl.program_id(2)

    @pl.when(k == 0)
    def _init():
        acc_ref[...] = jnp.zeros_like(acc_ref)

    # 1x1 conv == channel contraction on the MXU: (1,C) @ (C,thw) -> (1,thw) f32.
    # The MXU-dtype cast is done here, on the tile, so x is never re-written to
    # HBM by a wrapper-side cast pass.
    xb = x_ref[...].astype(mxu_dtype)
    y = jnp.dot(w_ref[...], xb, preferred_element_type=jnp.float32)

    # Pack the lane-only (1, thw) result into all 8 sublanes -> (8, T) via an
    # explicit VMEM round trip (guaranteed lowering, ~thw*4 bytes per step), so
    # the elementwise chain below runs at full vreg occupancy.
    for r in range(8):
        y_ref[pl.ds(r, 1), :] = y[:, r * t_lanes:(r + 1) * t_lanes]
    y8 = y_ref[...]                                          # (8, T) f32

    b = b_ref[0, 0]                                          # conv bias (SMEM)
    p = pl.reciprocal(1.0 + jnp.exp(-(y8 + b)), approx=True)  # sigmoid, EUP only
    d = p - gt_ref[0]                                        # (8, T) f32
    d2 = d * d
    if padded:
        # Mask squared-error lanes past the true H*W (pixel index of packed
        # position (r, c) within this tile is r*T + c).
        base = (pl.program_id(1) * k_steps + k) * thw
        row = lax.broadcasted_iota(jnp.int32, d2.shape, 0)
        col = lax.broadcasted_iota(jnp.int32, d2.shape, 1)
        d2 = jnp.where(base + row * t_lanes + col < hw, d2, 0.0)
    acc_ref[...] += d2

    @pl.when(k == k_steps - 1)
    def _finalize():
        # One cross-lane/sublane reduce per (n, p); broadcast the partial sum
        # into the (1, 8, 128) output block (wrapper reads element [0, 0]).
        o_ref[...] = jnp.broadcast_to(jnp.sum(acc_ref[...]), o_ref.shape)


def salience_map_mse(x, gt, weight, bias, *, max_tile_bytes=8 << 20,
                     mxu_dtype=jnp.bfloat16, n_parallel_chunks=2):
    """x: (N, 256, H, W) NCHW; gt: (N, 1, Hg, Wg); weight: (1, 256, 1, 1);
    bias: (1,). Returns the scalar MSE loss."""
    N, C, H, W = x.shape
    HW = H * W
    itemsize = jnp.dtype(x.dtype).itemsize
    max_tile_px = max(1024, (max_tile_bytes // (C * itemsize)) // 1024 * 1024)
    thw, P, K, hw_pad = _plan_tiles(HW, max_tile_px, n_parallel_chunks)
    T = thw // 8
    padded = hw_pad != HW

    # x: free NCHW -> (N*C, HW) view, kept in the input dtype (no cast pass).
    x2 = x.reshape(N * C, HW)
    if padded:
        # TODO(synk): this zero-pad is one extra pass over x for non-aligned
        # H*W; fold it into the kernel (clamped last-tile DMA) if that matters.
        x2 = jnp.pad(x2, ((0, 0), (0, hw_pad - HW)))

    gt_up = _upsample_bilinear_align_corners(gt, H, W)        # (N, 1, H, W) f32
    gt2 = gt_up.reshape(N, HW)
    if padded:
        gt2 = jnp.pad(gt2, ((0, 0), (0, hw_pad - HW)))
    # Same (8, T) tile layout the kernel packs y into (row-major, free reshape).
    gt2 = gt2.reshape(N, hw_pad // T, T).astype(jnp.float32)

    w2 = weight.reshape(1, C).astype(mxu_dtype)               # (1, C)
    b2 = bias.reshape(1, 1).astype(jnp.float32)               # (1, 1) -> SMEM

    kernel = functools.partial(
        _salience_mse_kernel, hw=HW, thw=thw, t_lanes=T, k_steps=K,
        padded=padded, mxu_dtype=mxu_dtype)

    # Double-buffered x tiles + in-kernel cast temp + slack; >= default scoped
    # limits, well under v7x's 64 MiB physical VMEM per TensorCore.
    vmem_limit = int(max(40 << 20,
                         2 * C * thw * itemsize + 2 * C * thw + (16 << 20)))

    out = pl.pallas_call(
        kernel,
        out_shape=jax.ShapeDtypeStruct((N * P, 8, 128), jnp.float32),
        grid_spec=pltpu.PrefetchScalarGridSpec(
            num_scalar_prefetch=0,
            grid=(N, P, K),
            in_specs=[
                # x: rows [n*C, (n+1)*C), pixel tile p*K + k
                pl.BlockSpec((C, thw), lambda n, p, k: (n, p * K + k)),
                # upsampled gt in the packed (8, T) tile layout
                pl.BlockSpec((1, 8, T), lambda n, p, k: (n, p * K + k, 0)),
                # conv weight: resident (tiny)
                pl.BlockSpec((1, C), lambda n, p, k: (0, 0)),
                # conv bias: a single SMEM scalar
                pl.BlockSpec(memory_space=pltpu.MemorySpace.SMEM),
            ],
            out_specs=pl.BlockSpec((1, 8, 128),
                                   lambda n, p, k: (n * P + p, 0, 0)),
            scratch_shapes=[pltpu.VMEM((8, T), jnp.float32),   # accumulator
                            pltpu.VMEM((8, T), jnp.float32)],  # packed y
        ),
        compiler_params=pltpu.CompilerParams(
            dimension_semantics=("parallel", "parallel", "arbitrary"),
            vmem_limit_bytes=vmem_limit),
    )(x2, gt2, w2, b2)

    # Per-(batch, chunk) partial sums -> global mean over the true pixel count.
    return out[:, 0, 0].sum() / jnp.float32(N * HW)


# ----------------------------- demo / self-check ------------------------------
if __name__ == "__main__":
    key = jax.random.PRNGKey(0)
    kx, kg, kw, kb = jax.random.split(key, 4)

    N, C, H, W = 2, 256, 16, 16     # conv in_channels fixed at 256 by the module
    Hg, Wg = 8, 8                   # coarse gt salience map (gets upsampled)

    # Feed f32 features (PyTorch default) -> exercises the in-kernel bf16 cast.
    x = jax.random.normal(kx, (N, C, H, W), dtype=jnp.float32)
    gt = jax.random.uniform(kg, (N, 1, Hg, Wg), dtype=jnp.float32)

    # Deterministic Conv2d(256, 1, 1) parameters (PyTorch-default-style bounds).
    bound = 1.0 / (C ** 0.5)
    weight = jax.random.uniform(kw, (1, C, 1, 1), jnp.float32, -bound, bound)
    bias = jax.random.uniform(kb, (1,), jnp.float32, -bound, bound)

    loss = jax.jit(salience_map_mse)(x, gt, weight, bias)
    loss = jax.block_until_ready(loss)

    g_ref = _upsample_bilinear_align_corners(gt, H, W)

    # Reference matched to the kernel's bf16-MXU semantics (tight tolerance).
    x_bf = x.astype(jnp.bfloat16).astype(jnp.float32)
    w_bf = weight.reshape(1, C).astype(jnp.bfloat16).astype(jnp.float32)
    y_bf = jnp.einsum('nchw,oc->nohw', x_bf, w_bf) + bias[0]
    ref_bf16 = jnp.mean((jax.nn.sigmoid(y_bf) - g_ref) ** 2)

    # True f32 Conv2d reference (exact PyTorch semantics): documents the bf16
    # tradeoff; pass mxu_dtype=jnp.float32 to the wrapper for exact matching.
    y_f32 = jnp.einsum('nchw,oc->nohw', x, weight.reshape(1, C)) + bias[0]
    ref_f32 = jnp.mean((jax.nn.sigmoid(y_f32) - g_ref) ** 2)

    assert jnp.allclose(loss, ref_bf16, rtol=1e-2, atol=1e-6), (
        float(loss), float(ref_bf16))
    assert jnp.allclose(loss, ref_f32, rtol=3e-2, atol=1e-5), (
        float(loss), float(ref_f32))
    print("KERNEL_OK")
</pallas_src>

<mosaic_0001>
module attributes {stable_mosaic.version = 11 : i64} {
  func.func private @main(%arg0: i32) attributes {dimension_semantics = [#tpu.dimension_semantics<core_parallel>], iteration_bounds = array<i64: 2>, tpu.core_type = #tpu.core_type<sc_scalar_subcore>, window_params = []} {
    return
  }
}

module attributes {stable_mosaic.version = 11 : i64} {
  func.func private @main(%arg0: i32) attributes {dimension_semantics = [#tpu.dimension_semantics<core_parallel>], iteration_bounds = array<i64: 2>, tpu.core_type = #tpu.core_type<sc_scalar_subcore>, window_params = []} {
    return
  }
}

module attributes {stable_mosaic.version = 11 : i64} {
  func.func @_salience_mse_kernel(%arg0: i32, %arg1: i32, %arg2: i32, %arg3: memref<256x1024xf32, #tpu.memory_space<vmem>>, %arg4: memref<1x8x128xf32, #tpu.memory_space<vmem>>, %arg5: memref<1x256xbf16, #tpu.memory_space<vmem>>, %arg6: memref<1x1xf32, #tpu.memory_space<smem>>, %arg7: memref<1x8x128xf32, #tpu.memory_space<vmem>>, %arg8: memref<8x128xf32, #tpu.memory_space<vmem>>, %arg9: memref<8x128xf32, #tpu.memory_space<vmem>>) attributes {dimension_semantics = [#tpu.dimension_semantics<parallel>, #tpu.dimension_semantics<parallel>, #tpu.dimension_semantics<arbitrary>], iteration_bounds = array<i64: 2, 1, 1>, scalar_prefetch = 0 : i64, scratch_operands = 2 : i64, tpu.core_type = #tpu.core_type<tc>, window_params = [{transform_indices = @transform_0, window_bounds = array<i64: 256, 1024>}, {transform_indices = @transform_1, window_bounds = array<i64: 1, 8, 128>}, {pipeline_mode = #tpu.pipeline_mode<synchronous>, transform_indices = @transform_2, window_bounds = array<i64: 1, 256>}, {transform_indices = @transform_3, window_bounds = array<i64: 1, 1>}, {transform_indices = @transform_4, window_bounds = array<i64: 1, 8, 128>}]} {
    %c0_i32 = arith.constant 0 : i32
    %0 = arith.cmpi eq, %arg2, %c0_i32 : i32
    %1 = arith.extui %0 : i1 to i32
    %c0_i32_0 = arith.constant 0 : i32
    %2 = arith.cmpi ne, %1, %c0_i32_0 : i32
    scf.if %2 {
      %cst_29 = arith.constant 0.000000e+00 : f32
      %57 = vector.broadcast %cst_29 : f32 to vector<8x128xf32>
      %c0_30 = arith.constant 0 : index
      %c0_31 = arith.constant 0 : index
      %58 = vector.load %arg8[%c0_30, %c0_31] : memref<8x128xf32, #tpu.memory_space<vmem>>, vector<8x128xf32>
      tpu.vector_store %arg8[%c0_30, %c0_31], %57 {strides = array<i32>} : memref<8x128xf32, #tpu.memory_space<vmem>>, vector<8x128xf32>,
    } else {
    }
    %c0 = arith.constant 0 : index
    %c0_1 = arith.constant 0 : index
    %3 = vector.load %arg3[%c0, %c0_1] : memref<256x1024xf32, #tpu.memory_space<vmem>>, vector<256x1024xf32>
    %4 = arith.truncf %3 : vector<256x1024xf32> to vector<256x1024xbf16>
    %c0_2 = arith.constant 0 : index
    %c0_3 = arith.constant 0 : index
    %5 = vector.load %arg5[%c0_2, %c0_3] : memref<1x256xbf16, #tpu.memory_space<vmem>>, vector<1x256xbf16>
    %cst = arith.constant dense<0.000000e+00> : vector<1x1024xf32>
    %6 = tpu.matmul %5, %4, %cst {dimension_numbers = #tpu.dot_dimension_numbers<[1], [0], [0], [1], [0, 0, 1, 1], [], []>} : vector<1x256xbf16>, vector<256x1024xbf16>, vector<1x1024xf32> -> vector<1x1024xf32>
    %7 = vector.extract_strided_slice %6 {offsets = [0, 0], sizes = [1, 128], strides = [1, 1]} : vector<1x1024xf32> to vector<1x128xf32>
    %c0_4 = arith.constant 0 : index
    %c0_5 = arith.constant 0 : index
    %8 = vector.load %arg9[%c0_4, %c0_5] : memref<8x128xf32, #tpu.memory_space<vmem>>, vector<1x128xf32>
    tpu.vector_store %arg9[%c0_4, %c0_5], %7 {strides = array<i32>} : memref<8x128xf32, #tpu.memory_space<vmem>>, vector<1x128xf32>,
    %9 = vector.extract_strided_slice %6 {offsets = [0, 128], sizes = [1, 128], strides = [1, 1]} : vector<1x1024xf32> to vector<1x128xf32>
    %c1 = arith.constant 1 : index
    %c0_6 = arith.constant 0 : index
    %10 = vector.load %arg9[%c1, %c0_6] : memref<8x128xf32, #tpu.memory_space<vmem>>, vector<1x128xf32>
    tpu.vector_store %arg9[%c1, %c0_6], %9 {strides = array<i32>} : memref<8x128xf32, #tpu.memory_space<vmem>>, vector<1x128xf32>,
    %11 = vector.extract_strided_slice %6 {offsets = [0, 256], sizes = [1, 128], strides = [1, 1]} : vector<1x1024xf32> to vector<1x128xf32>
    %c2 = arith.constant 2 : index
    %c0_7 = arith.constant 0 : index
    %12 = vector.load %arg9[%c2, %c0_7] : memref<8x128xf32, #tpu.memory_space<vmem>>, vector<1x128xf32>
    tpu.vector_store %arg9[%c2, %c0_7], %11 {strides = array<i32>} : memref<8x128xf32, #tpu.memory_space<vmem>>, vector<1x128xf32>,
    %13 = vector.extract_strided_slice %6 {offsets = [0, 384], sizes = [1, 128], strides = [1, 1]} : vector<1x1024xf32> to vector<1x128xf32>
    %c3 = arith.constant 3 : index
    %c0_8 = arith.constant 0 : index
    %14 = vector.load %arg9[%c3, %c0_8] : memref<8x128xf32, #tpu.memory_space<vmem>>, vector<1x128xf32>
    tpu.vector_store %arg9[%c3, %c0_8], %13 {strides = array<i32>} : memref<8x128xf32, #tpu.memory_space<vmem>>, vector<1x128xf32>,
    %15 = vector.extract_strided_slice %6 {offsets = [0, 512], sizes = [1, 128], strides = [1, 1]} : vector<1x1024xf32> to vector<1x128xf32>
    %c4 = arith.constant 4 : index
    %c0_9 = arith.constant 0 : index
    %16 = vector.load %arg9[%c4, %c0_9] : memref<8x128xf32, #tpu.memory_space<vmem>>, vector<1x128xf32>
    tpu.vector_store %arg9[%c4, %c0_9], %15 {strides = array<i32>} : memref<8x128xf32, #tpu.memory_space<vmem>>, vector<1x128xf32>,
    %17 = vector.extract_strided_slice %6 {offsets = [0, 640], sizes = [1, 128], strides = [1, 1]} : vector<1x1024xf32> to vector<1x128xf32>
    %c5 = arith.constant 5 : index
    %c0_10 = arith.constant 0 : index
    %18 = vector.load %arg9[%c5, %c0_10] : memref<8x128xf32, #tpu.memory_space<vmem>>, vector<1x128xf32>
    tpu.vector_store %arg9[%c5, %c0_10], %17 {strides = array<i32>} : memref<8x128xf32, #tpu.memory_space<vmem>>, vector<1x128xf32>,
    %19 = vector.extract_strided_slice %6 {offsets = [0, 768], sizes = [1, 128], strides = [1, 1]} : vector<1x1024xf32> to vector<1x128xf32>
    %c6 = arith.constant 6 : index
    %c0_11 = arith.constant 0 : index
    %20 = vector.load %arg9[%c6, %c0_11] : memref<8x128xf32, #tpu.memory_space<vmem>>, vector<1x128xf32>
    tpu.vector_store %arg9[%c6, %c0_11], %19 {strides = array<i32>} : memref<8x128xf32, #tpu.memory_space<vmem>>, vector<1x128xf32>,
    %21 = vector.extract_strided_slice %6 {offsets = [0, 896], sizes = [1, 128], strides = [1, 1]} : vector<1x1024xf32> to vector<1x128xf32>
    %c7 = arith.constant 7 : index
    %c0_12 = arith.constant 0 : index
    %22 = vector.load %arg9[%c7, %c0_12] : memref<8x128xf32, #tpu.memory_space<vmem>>, vector<1x128xf32>
    tpu.vector_store %arg9[%c7, %c0_12], %21 {strides = array<i32>} : memref<8x128xf32, #tpu.memory_space<vmem>>, vector<1x128xf32>,
    %c0_13 = arith.constant 0 : index
    %c0_14 = arith.constant 0 : index
    %23 = vector.load %arg9[%c0_13, %c0_14] : memref<8x128xf32, #tpu.memory_space<vmem>>, vector<8x128xf32>
    %c0_15 = arith.constant 0 : index
    %c0_16 = arith.constant 0 : index
    %24 = memref.load %arg6[%c0_15, %c0_16] : memref<1x1xf32, #tpu.memory_space<smem>>
    %25 = vector.broadcast %24 : f32 to vector<8x128xf32>
    %26 = arith.addf %23, %25 : vector<8x128xf32>
    %cst_17 = arith.constant 0.000000e+00 : f32
    %27 = vector.broadcast %cst_17 : f32 to vector<8x128xf32>
    %28 = arith.subf %27, %26 : vector<8x128xf32>
    %29 = math.exp %28 : vector<8x128xf32>
    %cst_18 = arith.constant 1.000000e+00 : f32
    %30 = vector.broadcast %cst_18 : f32 to vector<8x128xf32>
    %31 = arith.addf %30, %29 : vector<8x128xf32>
    %32 = tpu.reciprocal %31 {approx = true} : vector<8x128xf32> -> vector<8x128xf32>
    %c0_19 = arith.constant 0 : index
    %c0_20 = arith.constant 0 : index
    %c0_21 = arith.constant 0 : index
    %33 = vector.load %arg4[%c0_19, %c0_20, %c0_21] : memref<1x8x128xf32, #tpu.memory_space<vmem>>, vector<1x8x128xf32>
    %34 = vector.shape_cast %33 : vector<1x8x128xf32> to vector<8x128xf32>
    %35 = arith.subf %32, %34 : vector<8x128xf32>
    %36 = arith.mulf %35, %35 : vector<8x128xf32>
    %c1_i32 = arith.constant 1 : i32
    %37 = arith.muli %arg1, %c1_i32 : i32
    %38 = arith.addi %37, %arg2 : i32
    %c1024_i32 = arith.constant 1024 : i32
    %39 = arith.muli %38, %c1024_i32 : i32
    %40 = tpu.iota {dimensions = array<i32: 0>} : vector<8x128xi32>
    %41 = tpu.iota {dimensions = array<i32: 1>} : vector<8x128xi32>
    %c128_i32 = arith.constant 128 : i32
    %42 = vector.broadcast %c128_i32 : i32 to vector<8x128xi32>
    %43 = arith.muli %40, %42 : vector<8x128xi32>
    %44 = vector.broadcast %39 : i32 to vector<8x128xi32>
    %45 = arith.addi %44, %43 : vector<8x128xi32>
    %46 = arith.addi %45, %41 : vector<8x128xi32>
    %c256_i32 = arith.constant 256 : i32
    %47 = vector.broadcast %c256_i32 : i32 to vector<8x128xi32>
    %48 = arith.cmpi slt, %46, %47 : vector<8x128xi32>
    %cst_22 = arith.constant 0.000000e+00 : f32
    %49 = vector.broadcast %cst_22 : f32 to vector<8x128xf32>
    %50 = arith.select %48, %36, %49 : vector<8x128xi1>, vector<8x128xf32>
    %c0_23 = arith.constant 0 : index
    %c0_24 = arith.constant 0 : index
    %51 = vector.load %arg8[%c0_23, %c0_24] : memref<8x128xf32, #tpu.memory_space<vmem>>, vector<8x128xf32>
    %52 = arith.addf %51, %50 : vector<8x128xf32>
    %c0_25 = arith.constant 0 : index
    %c0_26 = arith.constant 0 : index
    %53 = vector.load %arg8[%c0_25, %c0_26] : memref<8x128xf32, #tpu.memory_space<vmem>>, vector<8x128xf32>
    tpu.vector_store %arg8[%c0_25, %c0_26], %52 {strides = array<i32>} : memref<8x128xf32, #tpu.memory_space<vmem>>, vector<8x128xf32>,
    %c0_i32_27 = arith.constant 0 : i32
    %54 = arith.cmpi eq, %arg2, %c0_i32_27 : i32
    %55 = arith.extui %54 : i1 to i32
    %c0_i32_28 = arith.constant 0 : i32
    %56 = arith.cmpi ne, %55, %c0_i32_28 : i32
    scf.if %56 {
      %c0_29 = arith.constant 0 : index
      %c0_30 = arith.constant 0 : index
      %57 = vector.load %arg8[%c0_29, %c0_30] : memref<8x128xf32, #tpu.memory_space<vmem>>, vector<8x128xf32>
      %58 = vector.shape_cast %57 : vector<8x128xf32> to vector<1x8x128xf32>
      %cst_31 = arith.constant dense<0.000000e+00> : vector<1xf32>
      %59 = vector.multi_reduction <add>, %58, %cst_31 [1, 2] : vector<1x8x128xf32> to vector<1xf32>
      %60 = vector.shape_cast %59 : vector<1xf32> to vector<1x1x1xf32>
      %61 = vector.extract %60[0, 0, 0] : f32 from vector<1x1x1xf32>
      %62 = vector.broadcast %61 : f32 to vector<1x8x128xf32>
      %c0_32 = arith.constant 0 : index
      %c0_33 = arith.constant 0 : index
      %c0_34 = arith.constant 0 : index
      %63 = vector.load %arg7[%c0_32, %c0_33, %c0_34] : memref<1x8x128xf32, #tpu.memory_space<vmem>>, vector<1x8x128xf32>
      tpu.vector_store %arg7[%c0_32, %c0_33, %c0_34], %62 {strides = array<i32>} : memref<1x8x128xf32, #tpu.memory_space<vmem>>, vector<1x8x128xf32>,
    } else {
    }
    return
  }
  func.func @transform_0(%arg0: i32, %arg1: i32, %arg2: i32) -> (i32, i32) {
    %c1_i32 = arith.constant 1 : i32
    %0 = arith.muli %arg1, %c1_i32 : i32
    %1 = arith.addi %0, %arg2 : i32
    %c0_i32 = arith.constant 0 : i32
    return %arg0, %1 : i32, i32
  }
  func.func @transform_1(%arg0: i32, %arg1: i32, %arg2: i32) -> (i32, i32, i32) {
    %c1_i32 = arith.constant 1 : i32
    %0 = arith.muli %arg1, %c1_i32 : i32
    %1 = arith.addi %0, %arg2 : i32
    %c0_i32 = arith.constant 0 : i32
    %c0_i32_0 = arith.constant 0 : i32
    return %arg0, %1, %c0_i32 : i32, i32, i32
  }
  func.func @transform_2(%arg0: i32, %arg1: i32, %arg2: i32) -> (i32, i32) {
    %c0_i32 = arith.constant 0 : i32
    %c0_i32_0 = arith.constant 0 : i32
    %c0_i32_1 = arith.constant 0 : i32
    return %c0_i32, %c0_i32_0 : i32, i32
  }
  func.func @transform_3(%arg0: i32, %arg1: i32, %arg2: i32) -> (i32, i32) {
    %c0_i32 = arith.constant 0 : i32
    %c0_i32_0 = arith.constant 0 : i32
    %c0_i32_1 = arith.constant 0 : i32
    return %c0_i32, %c0_i32_0 : i32, i32
  }
  func.func @transform_4(%arg0: i32, %arg1: i32, %arg2: i32) -> (i32, i32, i32) {
    %c1_i32 = arith.constant 1 : i32
    %0 = arith.muli %arg0, %c1_i32 : i32
    %1 = arith.addi %0, %arg1 : i32
    %c0_i32 = arith.constant 0 : i32
    %c0_i32_0 = arith.constant 0 : i32
    %c0_i32_1 = arith.constant 0 : i32
    return %1, %c0_i32, %c0_i32_0 : i32, i32, i32
  }
}

</mosaic_0001>

<llo_original>
// kernel: salience_map_mse.1
$region0: #{salience_map_mse.1}
  #allocation0 [shape = 'u32[]', space=smem, size = 0x4, offset = 0x4, fixed_abs, tag = 'smem constant byte address 0x4 - core index']
  #allocation1 [shape = 'u32[144,128]{1,0:T(1,128)}', space=vmem, size = 0x12000, scoped, tag = 'internal scratch']
  #allocation2 [shape = 'f32[8,128]{1,0:T(8,128)}', space=vmem, size = 0x1000, scoped, tag = 'scratch operand']
  #allocation3 [shape = 'f32[8,128]{1,0:T(8,128)}', space=vmem, size = 0x1000, scoped, tag = 'scratch operand']
  #allocation4 [shape = 'f32[1,1]{1,0:T(1,128)S(6)}', space=smem, size = 0x200, scoped, tag = 'scoped memory for salience_map_mse.1']
  %s0 = inlined_call_operand.vmem [shape: f32[512,1024], index: 0, kind: input, shape index: {}]
  %s1 = inlined_call_operand.vmem [shape: f32[2,8,128], index: 1, kind: input, shape index: {}]
  %s2 = inlined_call_operand.vmem [shape: bf16[1,256], index: 2, kind: input, shape index: {}]
  %s3 = inlined_call_operand.<no memory space> [shape: f32[1,1], index: 3, kind: input, shape index: {}]
  %s4 = inlined_call_operand.vmem [shape: f32[2,8,128], index: 4, kind: output, shape index: {}]
  %s5 = sld [smem:[#allocation0]]
  $region57: #{salience_map_mse.1} parent=0
    _
  %s7 = ssub.s32 1, %s5
  %s8 = scalar_select 0, %s7, %s5
  %9 = sst [smem:[#allocation4]] %s3
  loop: start=0, step=1, limit=4
  $region2: #{salience_map_mse.1} parent=0 // loop_pre_header
    _
  $region3: #{salience_map_mse.1} parent=0 // loop_header
    %s11 = sphi 0, %s15
    %p12 = scmp.ge.s32.totalorder %s11, 4
    %s18 = sphi 0, %s37
    %s19 = sphi 0, %s33
    %s20 = sphi 0, %s29
    %s21 = sphi 0, %s18
    %s22 = sphi 0, %s19
    %s23 = sphi 0, %s20
    %s24 = sphi 0, %s21
    %s25 = sphi 0, %s22
    %s26 = sphi 0, %s23
    %s44 = sphi 0, %s46
    %s47 = sphi 0, %s44
    %s48 = sphi 0, %s47
    %s64 = sphi 0, %s48
    %s74 = sphi 0, %s76
    %s77 = sphi 0, %s74
    %s78 = sphi 0, %s77
    %s94 = sphi 0, %s78
    %s98 = sphi 0, %s98
    %s100 = sphi 0, %s98
    %s101 = sphi 0, %s100
    %s115 = sphi 0, %s101
    %s119 = sphi 0, %s119
    %s121 = sphi 0, %s119
    %s122 = sphi 0, %s121
    %s136 = sphi 0, %s122
    %s144 = sphi 0, %s146
    %s147 = sphi 0, %s144
    %s148 = sphi 0, %s147
    %s164 = sphi 0, %s148
  $region4: #{salience_map_mse.1} parent=0 // loop_header_branch
    %14 = sbr.rel (%p12) target = $region8
  $region5: #{salience_map_mse.1} parent=0 // loop_body
    %s16 = ssub.s32 %s11, 1
    %s17 = ssub.s32 %s11, 2
    %s27 = sadd.s32 1, %s20
    %p28 = scmp.ge.s32.totalorder %s27, 1
    %s29 = scalar_select %p28, 0, %s27
    %s30 = sadd.s32 1, %s19
    %s31 = scalar_select %p28, %s30, %s19
    %p32 = scmp.ge.s32.totalorder %s31, 1
    %s33 = scalar_select %p32, 0, %s31
    %s34 = sadd.s32 1, %s18
    %s35 = scalar_select %p32, %s34, %s18
    %p36 = scmp.ge.s32.totalorder %s35, 2
    %s37 = scalar_select %p36, 0, %s35
    %s38 = sadd.s32 %s19, %s20
    %s39 = sadd.s32 %s33, %s29
    %s40 = ssub.s32 %s18, %s37
    %s41 = ssub.s32 %s38, %s39
    %s42 = sor.u32 %s40, %s41
    %p43 = scmp.eq.s32.totalorder %s42, 0
    %s45 = sadd.s32 %s44, 1
    %s46 = scalar_select %p43, %s44, %s45
    %p49 = pneg %p43
    %p50 = scmp.eq.s32.totalorder %s11, 1
    %p51 = por %p49, %p50
    %p52 = scmp.ne.s32.totalorder %s44, %s47
    %p53 = scmp.eq.s32.totalorder %s11, 0
    %p54 = por %p52, %p53
    %p55 = scmp.ne.s32.totalorder %s44, %s47
    %p56 = scmp.eq.s32.totalorder %s16, 1
    %p57 = por %p55, %p56
    %p58 = scmp.ne.s32.totalorder %s47, %s48
    %p59 = scmp.eq.s32.totalorder %s16, 0
    %p60 = por %p58, %p59
    %p61 = scmp.ne.s32.totalorder %s47, %s48
    %p62 = scmp.eq.s32.totalorder %s17, 1
    %p63 = por %p61, %p62
    %p65 = scmp.ne.s32.totalorder %s48, %s64
    %p66 = scmp.eq.s32.totalorder %s17, 0
    %p67 = por %p65, %p66
    %s68 = sadd.s32 %s19, %s20
    %s69 = sadd.s32 %s33, %s29
    %s70 = ssub.s32 %s18, %s37
    %s71 = ssub.s32 %s68, %s69
    %s72 = sor.u32 %s70, %s71
    %p73 = scmp.eq.s32.totalorder %s72, 0
    %s75 = sadd.s32 %s74, 1
    %s76 = scalar_select %p73, %s74, %s75
    %p79 = pneg %p73
    %p80 = scmp.eq.s32.totalorder %s11, 1
    %p81 = por %p79, %p80
    %p82 = scmp.ne.s32.totalorder %s74, %s77
    %p83 = scmp.eq.s32.totalorder %s11, 0
    %p84 = por %p82, %p83
    %p85 = scmp.ne.s32.totalorder %s74, %s77
    %p86 = scmp.eq.s32.totalorder %s16, 1
    %p87 = por %p85, %p86
    %p88 = scmp.ne.s32.totalorder %s77, %s78
    %p89 = scmp.eq.s32.totalorder %s16, 0
    %p90 = por %p88, %p89
    %p91 = scmp.ne.s32.totalorder %s77, %s78
    %p92 = scmp.eq.s32.totalorder %s17, 1
    %p93 = por %p91, %p92
    %p95 = scmp.ne.s32.totalorder %s78, %s94
    %p96 = scmp.eq.s32.totalorder %s17, 0
    %p97 = por %p95, %p96
    %s99 = sadd.s32 %s98, 1
    %p102 = scmp.eq.s32.totalorder %s11, 1
    %p103 = scmp.ne.s32.totalorder %s98, %s100
    %p104 = scmp.eq.s32.totalorder %s11, 0
    %p105 = por %p103, %p104
    %p106 = scmp.ne.s32.totalorder %s98, %s100
    %p107 = scmp.eq.s32.totalorder %s16, 1
    %p108 = por %p106, %p107
    %p109 = scmp.ne.s32.totalorder %s100, %s101
    %p110 = scmp.eq.s32.totalorder %s16, 0
    %p111 = por %p109, %p110
    %p112 = scmp.ne.s32.totalorder %s100, %s101
    %p113 = scmp.eq.s32.totalorder %s17, 1
    %p114 = por %p112, %p113
    %p116 = scmp.ne.s32.totalorder %s101, %s115
    %p117 = scmp.eq.s32.totalorder %s17, 0
    %p118 = por %p116, %p117
    %s120 = sadd.s32 %s119, 1
    %p123 = scmp.eq.s32.totalorder %s11, 1
    %p124 = scmp.ne.s32.totalorder %s119, %s121
    %p125 = scmp.eq.s32.totalorder %s11, 0
    %p126 = por %p124, %p125
    %p127 = scmp.ne.s32.totalorder %s119, %s121
    %p128 = scmp.eq.s32.totalorder %s16, 1
    %p129 = por %p127, %p128
    %p130 = scmp.ne.s32.totalorder %s121, %s122
    %p131 = scmp.eq.s32.totalorder %s16, 0
    %p132 = por %p130, %p131
    %p133 = scmp.ne.s32.totalorder %s121, %s122
    %p134 = scmp.eq.s32.totalorder %s17, 1
    %p135 = por %p133, %p134
    %p137 = scmp.ne.s32.totalorder %s122, %s136
    %p138 = scmp.eq.s32.totalorder %s17, 0
    %p139 = por %p137, %p138
    %s140 = sadd.s32 %s18, %s19
    %s141 = sadd.s32 %s37, %s33
    %s142 = ssub.s32 %s140, %s141
    %p143 = scmp.eq.s32.totalorder %s142, 0
    %s145 = sadd.s32 %s144, 1
    %s146 = scalar_select %p143, %s144, %s145
    %p149 = pneg %p143
    %p150 = scmp.eq.s32.totalorder %s11, 1
    %p151 = por %p149, %p150
    %p152 = scmp.ne.s32.totalorder %s144, %s147
    %p153 = scmp.eq.s32.totalorder %s11, 0
    %p154 = por %p152, %p153
    %p155 = scmp.ne.s32.totalorder %s144, %s147
    %p156 = scmp.eq.s32.totalorder %s16, 1
    %p157 = por %p155, %p156
    %p158 = scmp.ne.s32.totalorder %s147, %s148
    %p159 = scmp.eq.s32.totalorder %s16, 0
    %p160 = por %p158, %p159
    %p161 = scmp.ne.s32.totalorder %s147, %s148
    %p162 = scmp.eq.s32.totalorder %s17, 1
    %p163 = por %p161, %p162
    %p165 = scmp.ne.s32.totalorder %s148, %s164
    %p166 = scmp.eq.s32.totalorder %s17, 0
    %p167 = por %p165, %p166
    %p168 = scmp.le.s32.totalorder 1, %s11
    %p169 = scmp.lt.s32.totalorder %s11, 3
    %p170 = pnand %p168, %p169
    %p171 = pneg %p170
    // Predicated region
    $region9: #{salience_map_mse.1} parent=5 // pred_check
      _
    $region10: #{salience_map_mse.1} parent=5 // pred_check_branch
      %173 = sbr.rel (%p170) target = $region12
    $region11: #{salience_map_mse.1} parent=5 // pred_region
      %s174 = ssub.s32 %s11, 1
      // Predicated region
      $region13: #{salience_map_mse.1} parent=11 // pred_check
        %p175 = pneg %p111
      $region14: #{salience_map_mse.1} parent=11 // pred_check_branch
        %177 = sbr.rel (%p175) target = $region16
      $region15: #{salience_map_mse.1} parent=11 // pred_region
        _
      $region16: #{salience_map_mse.1} parent=11 // pred_fallthru
        _
      // Predicated region
      $region17: #{salience_map_mse.1} parent=11 // pred_check
        %p178 = pneg %p132
      $region18: #{salience_map_mse.1} parent=11 // pred_check_branch
        %180 = sbr.rel (%p178) target = $region20
      $region19: #{salience_map_mse.1} parent=11 // pred_region
        _
      $region20: #{salience_map_mse.1} parent=11 // pred_fallthru
        _
    $region12: #{salience_map_mse.1} parent=5 // pred_fallthru
      _
    %p181 = scmp.lt.s32.totalorder %s11, 2
    // Predicated region
    $region21: #{salience_map_mse.1} parent=5 // pred_check
      %p182 = pneg %p181
    $region22: #{salience_map_mse.1} parent=5 // pred_check_branch
      %184 = sbr.rel (%p182) target = $region24
    $region23: #{salience_map_mse.1} parent=5 // pred_region
      // Predicated region
      $region25: #{salience_map_mse.1} parent=23 // pred_check
        %p185 = pneg %p54
      $region26: #{salience_map_mse.1} parent=23 // pred_check_branch
        %187 = sbr.rel (%p185) target = $region28
      $region27: #{salience_map_mse.1} parent=23 // pred_region
        %s188 = sadd.s32 %s19, %s20
        %s189 = smul.u32 32, %s18
        %s190 = smul.u32 8, %s188
        %p191 = scmp.lt.s32.totalorder %s189, 63
        %s192 = scalar_select %p191, %s189, 63
        %p193 = scmp.lt.s32.totalorder %s190, 7
        %s194 = scalar_select %p193, %s190, 7
        %s195 = smul.addr %s192, 8
        %s196 = sadd.s32 %s194, %s195
        %s197 = smul.addr %s196, 8
        %s198 = scalar_lea.vmem %s0, %s197
        %s199 = sadd.s32 %s19, %s20
        %s200 = smul.u32 32, %s18
        %s201 = smul.u32 8, %s199
      $region28: #{salience_map_mse.1} parent=23 // pred_fallthru
        _
      // Predicated region
      $region29: #{salience_map_mse.1} parent=23 // pred_check
        %p202 = pneg %p84
      $region30: #{salience_map_mse.1} parent=23 // pred_check_branch
        %204 = sbr.rel (%p202) target = $region32
      $region31: #{salience_map_mse.1} parent=23 // pred_region
        %s205 = sadd.s32 %s19, %s20
        %p206 = scmp.lt.s32.totalorder %s18, 1
        %s207 = scalar_select %p206, %s18, 1
        %p208 = scmp.lt.s32.totalorder %s205, 0
        %s209 = scalar_select %p208, %s205, 0
        %s210 = sadd.s32 %s209, %s207
        %s211 = smul.addr %s210, 8
        %s212 = scalar_lea.vmem %s1, %s211
        %s213 = sadd.s32 %s19, %s20
      $region32: #{salience_map_mse.1} parent=23 // pred_fallthru
        _
    $region24: #{salience_map_mse.1} parent=5 // pred_fallthru
      _
    %p214 = scmp.le.s32.totalorder 1, %s11
    %p215 = scmp.lt.s32.totalorder %s11, 3
    %p216 = pnand %p214, %p215
    %p217 = pneg %p216
    // Predicated region
    $region33: #{salience_map_mse.1} parent=5 // pred_check
      _
    $region34: #{salience_map_mse.1} parent=5 // pred_check_branch
      %219 = sbr.rel (%p216) target = $region36
    $region35: #{salience_map_mse.1} parent=5 // pred_region
      %s220 = ssub.s32 %s11, 1
      %s221 = sadd.s32 %s22, %s23
      %s222 = smul.u32 32, %s21
      %s223 = smul.u32 8, %s221
      %p224 = scmp.lt.s32.totalorder %s222, 63
      %s225 = scalar_select %p224, %s222, 63
      %p226 = scmp.lt.s32.totalorder %s223, 7
      %s227 = scalar_select %p226, %s223, 7
      %s228 = smul.addr %s225, 8
      %s229 = sadd.s32 %s227, %s228
      %s230 = smul.addr %s229, 8
      %s231 = scalar_lea.vmem %s0, %s230
      %p232 = pneg %p60
      %p233 = pneg %p57
      %s234 = sadd.s32 %s22, %s23
      %p235 = scmp.lt.s32.totalorder %s21, 1
      %s236 = scalar_select %p235, %s21, 1
      %p237 = scmp.lt.s32.totalorder %s234, 0
      %s238 = scalar_select %p237, %s234, 0
      %s239 = sadd.s32 %s238, %s236
      %s240 = smul.addr %s239, 8
      %s241 = scalar_lea.vmem %s1, %s240
      %p242 = pneg %p90
      %p243 = pneg %p87
      %p244 = pneg %p111
      %p245 = pneg %p108
      %p246 = pneg %p132
      %p247 = pneg %p129
      %p248 = pneg %p160
      %p249 = pneg %p157
      %s250 = sadd.s32 %s21, %s22
      %p251 = scmp.lt.s32.totalorder %s250, 1
      %s252 = scalar_select %p251, %s250, 1
      %s253 = smul.addr %s252, 8
      %s254 = scalar_lea.vmem %s4, %s253
      %s255 = sadd.s32 %s22, %s23
      %s256 = smul.u32 32, %s21
      %s257 = smul.u32 8, %s255
      %p258 = scmp.lt.s32.totalorder %s256, 63
      %s259 = scalar_select %p258, %s256, 63
      %p260 = scmp.lt.s32.totalorder %s257, 7
      %s261 = scalar_select %p260, %s257, 7
      %s262 = smul.addr %s259, 8
      %s263 = sadd.s32 %s261, %s262
      %s264 = smul.addr %s263, 8
      %s265 = scalar_lea.vmem %s0, %s264
      %s266 = sadd.s32 %s22, %s23
      %s267 = smul.u32 32, %s21
      %s268 = smul.u32 8, %s266
      %s269 = sadd.s32 %s22, %s23
      %p270 = scmp.lt.s32.totalorder %s21, 1
      %s271 = scalar_select %p270, %s21, 1
      %p272 = scmp.lt.s32.totalorder %s269, 0
      %s273 = scalar_select %p272, %s269, 0
      %s274 = sadd.s32 %s273, %s271
      %s275 = smul.addr %s274, 8
      %s276 = scalar_lea.vmem %s1, %s275
      %s277 = sadd.s32 %s22, %s23
      %s278 = sadd.s32 %s21, %s22
      %p279 = scmp.lt.s32.totalorder %s278, 1
      %s280 = scalar_select %p279, %s278, 1
      %s281 = smul.addr %s280, 8
      %s282 = scalar_lea.vmem %s4, %s281
      %s283 = sadd.s32 %s21, %s22
      %p284 = scmp.eq.s32.totalorder %s23, 0
      // Predicated region
      $region37: #{salience_map_mse.1} parent=35 // pred_check
        %p285 = pneg %p284
      $region38: #{salience_map_mse.1} parent=35 // pred_check_branch
        %287 = sbr.rel (%p285) target = $region40
      $region39: #{salience_map_mse.1} parent=35 // pred_region
        %288 = vst [vmem:[#allocation2] sm:$0xff] 0.0
      $region40: #{salience_map_mse.1} parent=35 // pred_fallthru
        _
      %v289 = vld [vmem:[%s265] sm:$0xff]
      %v290 = vld [vmem:[%s265 + $0x8] sm:$0xff]
      %v291 = vld [vmem:[%s265 + $0x10] sm:$0xff]
      %v292 = vld [vmem:[%s265 + $0x18] sm:$0xff]
      %v293 = vld [vmem:[%s265 + $0x20] sm:$0xff]
      %v294 = vld [vmem:[%s265 + $0x28] sm:$0xff]
      %v295 = vld [vmem:[%s265 + $0x30] sm:$0xff]
      %v296 = vld [vmem:[%s265 + $0x38] sm:$0xff]
      %v297 = vld [vmem:[%s265 + $0x40] sm:$0xff]
      %v298 = vld [vmem:[%s265 + $0x48] sm:$0xff]
      %v299 = vld [vmem:[%s265 + $0x50] sm:$0xff]
      %v300 = vld [vmem:[%s265 + $0x58] sm:$0xff]
      %v301 = vld [vmem:[%s265 + $0x60] sm:$0xff]
      %v302 = vld [vmem:[%s265 + $0x68] sm:$0xff]
      %v303 = vld [vmem:[%s265 + $0x70] sm:$0xff]
      %v304 = vld [vmem:[%s265 + $0x78] sm:$0xff]
      %v305 = vld [vmem:[%s265 + $0x80] sm:$0xff]
      %v306 = vld [vmem:[%s265 + $0x88] sm:$0xff]
      %v307 = vld [vmem:[%s265 + $0x90] sm:$0xff]
      %v308 = vld [vmem:[%s265 + $0x98] sm:$0xff]
      %v309 = vld [vmem:[%s265 + $0xa0] sm:$0xff]
      %v310 = vld [vmem:[%s265 + $0xa8] sm:$0xff]
      %v311 = vld [vmem:[%s265 + $0xb0] sm:$0xff]
      %v312 = vld [vmem:[%s265 + $0xb8] sm:$0xff]
      %v313 = vld [vmem:[%s265 + $0xc0] sm:$0xff]
      %v314 = vld [vmem:[%s265 + $0xc8] sm:$0xff]
      %v315 = vld [vmem:[%s265 + $0xd0] sm:$0xff]
      %v316 = vld [vmem:[%s265 + $0xd8] sm:$0xff]
      %v317 = vld [vmem:[%s265 + $0xe0] sm:$0xff]
      %v318 = vld [vmem:[%s265 + $0xe8] sm:$0xff]
      %v319 = vld [vmem:[%s265 + $0xf0] sm:$0xff]
      %v320 = vld [vmem:[%s265 + $0xf8] sm:$0xff]
      %v321 = vld [vmem:[%s265 + $0x100] sm:$0xff]
      %v322 = vld [vmem:[%s265 + $0x108] sm:$0xff]
      %v323 = vld [vmem:[%s265 + $0x110] sm:$0xff]
      %v324 = vld [vmem:[%s265 + $0x118] sm:$0xff]
      %v325 = vld [vmem:[%s265 + $0x120] sm:$0xff]
      %v326 = vld [vmem:[%s265 + $0x128] sm:$0xff]
      %v327 = vld [vmem:[%s265 + $0x130] sm:$0xff]
      %v328 = vld [vmem:[%s265 + $0x138] sm:$0xff]
      %v329 = vld [vmem:[%s265 + $0x140] sm:$0xff]
      %v330 = vld [vmem:[%s265 + $0x148] sm:$0xff]
      %v331 = vld [vmem:[%s265 + $0x150] sm:$0xff]
      %v332 = vld [vmem:[%s265 + $0x158] sm:$0xff]
      %v333 = vld [vmem:[%s265 + $0x160] sm:$0xff]
      %v334 = vld [vmem:[%s265 + $0x168] sm:$0xff]
      %v335 = vld [vmem:[%s265 + $0x170] sm:$0xff]
      %v336 = vld [vmem:[%s265 + $0x178] sm:$0xff]
      %v337 = vld [vmem:[%s265 + $0x180] sm:$0xff]
      %v338 = vld [vmem:[%s265 + $0x188] sm:$0xff]
      %v339 = vld [vmem:[%s265 + $0x190] sm:$0xff]
      %v340 = vld [vmem:[%s265 + $0x198] sm:$0xff]
      %v341 = vld [vmem:[%s265 + $0x1a0] sm:$0xff]
      %v342 = vld [vmem:[%s265 + $0x1a8] sm:$0xff]
      %v343 = vld [vmem:[%s265 + $0x1b0] sm:$0xff]
      %v344 = vld [vmem:[%s265 + $0x1b8] sm:$0xff]
      %v345 = vld [vmem:[%s265 + $0x1c0] sm:$0xff]
      %v346 = vld [vmem:[%s265 + $0x1c8] sm:$0xff]
      %v347 = vld [vmem:[%s265 + $0x1d0] sm:$0xff]
      %v348 = vld [vmem:[%s265 + $0x1d8] sm:$0xff]
      %v349 = vld [vmem:[%s265 + $0x1e0] sm:$0xff]
      %v350 = vld [vmem:[%s265 + $0x1e8] sm:$0xff]
      %v351 = vld [vmem:[%s265 + $0x1f0] sm:$0xff]
      %v352 = vld [vmem:[%s265 + $0x1f8] sm:$0xff]
      %v353 = vld [vmem:[%s265 + $0x200] sm:$0xff]
      %v354 = vld [vmem:[%s265 + $0x208] sm:$0xff]
      %v355 = vld [vmem:[%s265 + $0x210] sm:$0xff]
      %v356 = vld [vmem:[%s265 + $0x218] sm:$0xff]
      %v357 = vld [vmem:[%s265 + $0x220] sm:$0xff]
      %v358 = vld [vmem:[%s265 + $0x228] sm:$0xff]
      %v359 = vld [vmem:[%s265 + $0x230] sm:$0xff]
      %v360 = vld [vmem:[%s265 + $0x238] sm:$0xff]
      %v361 = vld [vmem:[%s265 + $0x240] sm:$0xff]
      %v362 = vld [vmem:[%s265 + $0x248] sm:$0xff]
      %v363 = vld [vmem:[%s265 + $0x250] sm:$0xff]
      %v364 = vld [vmem:[%s265 + $0x258] sm:$0xff]
      %v365 = vld [vmem:[%s265 + $0x260] sm:$0xff]
      %v366 = vld [vmem:[%s265 + $0x268] sm:$0xff]
      %v367 = vld [vmem:[%s265 + $0x270] sm:$0xff]
      %v368 = vld [vmem:[%s265 + $0x278] sm:$0xff]
      %v369 = vld [vmem:[%s265 + $0x280] sm:$0xff]
      %v370 = vld [vmem:[%s265 + $0x288] sm:$0xff]
      %v371 = vld [vmem:[%s265 + $0x290] sm:$0xff]
      %v372 = vld [vmem:[%s265 + $0x298] sm:$0xff]
      %v373 = vld [vmem:[%s265 + $0x2a0] sm:$0xff]
      %v374 = vld [vmem:[%s265 + $0x2a8] sm:$0xff]
      %v375 = vld [vmem:[%s265 + $0x2b0] sm:$0xff]
      %v376 = vld [vmem:[%s265 + $0x2b8] sm:$0xff]
      %v377 = vld [vmem:[%s265 + $0x2c0] sm:$0xff]
      %v378 = vld [vmem:[%s265 + $0x2c8] sm:$0xff]
      %v379 = vld [vmem:[%s265 + $0x2d0] sm:$0xff]
      %v380 = vld [vmem:[%s265 + $0x2d8] sm:$0xff]
      %v381 = vld [vmem:[%s265 + $0x2e0] sm:$0xff]
      %v382 = vld [vmem:[%s265 + $0x2e8] sm:$0xff]
      %v383 = vld [vmem:[%s265 + $0x2f0] sm:$0xff]
      %v384 = vld [vmem:[%s265 + $0x2f8] sm:$0xff]
      %v385 = vld [vmem:[%s265 + $0x300] sm:$0xff]
      %v386 = vld [vmem:[%s265 + $0x308] sm:$0xff]
      %v387 = vld [vmem:[%s265 + $0x310] sm:$0xff]
      %v388 = vld [vmem:[%s265 + $0x318] sm:$0xff]
      %v389 = vld [vmem:[%s265 + $0x320] sm:$0xff]
      %v390 = vld [vmem:[%s265 + $0x328] sm:$0xff]
      %v391 = vld [vmem:[%s265 + $0x330] sm:$0xff]
      %v392 = vld [vmem:[%s265 + $0x338] sm:$0xff]
      %v393 = vld [vmem:[%s265 + $0x340] sm:$0xff]
      %v394 = vld [vmem:[%s265 + $0x348] sm:$0xff]
      %v395 = vld [vmem:[%s265 + $0x350] sm:$0xff]
      %v396 = vld [vmem:[%s265 + $0x358] sm:$0xff]
      %v397 = vld [vmem:[%s265 + $0x360] sm:$0xff]
      %v398 = vld [vmem:[%s265 + $0x368] sm:$0xff]
      %v399 = vld [vmem:[%s265 + $0x370] sm:$0xff]
      %v400 = vld [vmem:[%s265 + $0x378] sm:$0xff]
      %v401 = vld [vmem:[%s265 + $0x380] sm:$0xff]
      %v402 = vld [vmem:[%s265 + $0x388] sm:$0xff]
      %v403 = vld [vmem:[%s265 + $0x390] sm:$0xff]
      %v404 = vld [vmem:[%s265 + $0x398] sm:$0xff]
      %v405 = vld [vmem:[%s265 + $0x3a0] sm:$0xff]
      %v406 = vld [vmem:[%s265 + $0x3a8] sm:$0xff]
      %v407 = vld [vmem:[%s265 + $0x3b0] sm:$0xff]
      %v408 = vld [vmem:[%s265 + $0x3b8] sm:$0xff]
      %v409 = vld [vmem:[%s265 + $0x3c0] sm:$0xff]
      %v410 = vld [vmem:[%s265 + $0x3c8] sm:$0xff]
      %v411 = vld [vmem:[%s265 + $0x3d0] sm:$0xff]
      %v412 = vld [vmem:[%s265 + $0x3d8] sm:$0xff]
      %v413 = vld [vmem:[%s265 + $0x3e0] sm:$0xff]
      %v414 = vld [vmem:[%s265 + $0x3e8] sm:$0xff]
      %v415 = vld [vmem:[%s265 + $0x3f0] sm:$0xff]
      %v416 = vld [vmem:[%s265 + $0x3f8] sm:$0xff]
      %v417 = vld [vmem:[%s265 + $0x400] sm:$0xff]
      %v418 = vld [vmem:[%s265 + $0x408] sm:$0xff]
      %v419 = vld [vmem:[%s265 + $0x410] sm:$0xff]
      %v420 = vld [vmem:[%s265 + $0x418] sm:$0xff]
      %v421 = vld [vmem:[%s265 + $0x420] sm:$0xff]
      %v422 = vld [vmem:[%s265 + $0x428] sm:$0xff]
      %v423 = vld [vmem:[%s265 + $0x430] sm:$0xff]
      %v424 = vld [vmem:[%s265 + $0x438] sm:$0xff]
      %v425 = vld [vmem:[%s265 + $0x440] sm:$0xff]
      %v426 = vld [vmem:[%s265 + $0x448] sm:$0xff]
      %v427 = vld [vmem:[%s265 + $0x450] sm:$0xff]
      %v428 = vld [vmem:[%s265 + $0x458] sm:$0xff]
      %v429 = vld [vmem:[%s265 + $0x460] sm:$0xff]
      %v430 = vld [vmem:[%s265 + $0x468] sm:$0xff]
      %v431 = vld [vmem:[%s265 + $0x470] sm:$0xff]
      %v432 = vld [vmem:[%s265 + $0x478] sm:$0xff]
      %v433 = vld [vmem:[%s265 + $0x480] sm:$0xff]
      %v434 = vld [vmem:[%s265 + $0x488] sm:$0xff]
      %v435 = vld [vmem:[%s265 + $0x490] sm:$0xff]
      %v436 = vld [vmem:[%s265 + $0x498] sm:$0xff]
      %v437 = vld [vmem:[%s265 + $0x4a0] sm:$0xff]
      %v438 = vld [vmem:[%s265 + $0x4a8] sm:$0xff]
      %v439 = vld [vmem:[%s265 + $0x4b0] sm:$0xff]
      %v440 = vld [vmem:[%s265 + $0x4b8] sm:$0xff]
      %v441 = vld [vmem:[%s265 + $0x4c0] sm:$0xff]
      %v442 = vld [vmem:[%s265 + $0x4c8] sm:$0xff]
      %v443 = vld [vmem:[%s265 + $0x4d0] sm:$0xff]
      %v444 = vld [vmem:[%s265 + $0x4d8] sm:$0xff]
      %v445 = vld [vmem:[%s265 + $0x4e0] sm:$0xff]
      %v446 = vld [vmem:[%s265 + $0x4e8] sm:$0xff]
      %v447 = vld [vmem:[%s265 + $0x4f0] sm:$0xff]
      %v448 = vld [vmem:[%s265 + $0x4f8] sm:$0xff]
      %v449 = vld [vmem:[%s265 + $0x500] sm:$0xff]
      %v450 = vld [vmem:[%s265 + $0x508] sm:$0xff]
      %v451 = vld [vmem:[%s265 + $0x510] sm:$0xff]
      %v452 = vld [vmem:[%s265 + $0x518] sm:$0xff]
      %v453 = vld [vmem:[%s265 + $0x520] sm:$0xff]
      %v454 = vld [vmem:[%s265 + $0x528] sm:$0xff]
      %v455 = vld [vmem:[%s265 + $0x530] sm:$0xff]
      %v456 = vld [vmem:[%s265 + $0x538] sm:$0xff]
      %v457 = vld [vmem:[%s265 + $0x540] sm:$0xff]
      %v458 = vld [vmem:[%s265 + $0x548] sm:$0xff]
      %v459 = vld [vmem:[%s265 + $0x550] sm:$0xff]
      %v460 = vld [vmem:[%s265 + $0x558] sm:$0xff]
      %v461 = vld [vmem:[%s265 + $0x560] sm:$0xff]
      %v462 = vld [vmem:[%s265 + $0x568] sm:$0xff]
      %v463 = vld [vmem:[%s265 + $0x570] sm:$0xff]
      %v464 = vld [vmem:[%s265 + $0x578] sm:$0xff]
      %v465 = vld [vmem:[%s265 + $0x580] sm:$0xff]
      %v466 = vld [vmem:[%s265 + $0x588] sm:$0xff]
      %v467 = vld [vmem:[%s265 + $0x590] sm:$0xff]
      %v468 = vld [vmem:[%s265 + $0x598] sm:$0xff]
      %v469 = vld [vmem:[%s265 + $0x5a0] sm:$0xff]
      %v470 = vld [vmem:[%s265 + $0x5a8] sm:$0xff]
      %v471 = vld [vmem:[%s265 + $0x5b0] sm:$0xff]
      %v472 = vld [vmem:[%s265 + $0x5b8] sm:$0xff]
      %v473 = vld [vmem:[%s265 + $0x5c0] sm:$0xff]
      %v474 = vld [vmem:[%s265 + $0x5c8] sm:$0xff]
      %v475 = vld [vmem:[%s265 + $0x5d0] sm:$0xff]
      %v476 = vld [vmem:[%s265 + $0x5d8] sm:$0xff]
      %v477 = vld [vmem:[%s265 + $0x5e0] sm:$0xff]
      %v478 = vld [vmem:[%s265 + $0x5e8] sm:$0xff]
      %v479 = vld [vmem:[%s265 + $0x5f0] sm:$0xff]
      %v480 = vld [vmem:[%s265 + $0x5f8] sm:$0xff]
      %v481 = vld [vmem:[%s265 + $0x600] sm:$0xff]
      %v482 = vld [vmem:[%s265 + $0x608] sm:$0xff]
      %v483 = vld [vmem:[%s265 + $0x610] sm:$0xff]
      %v484 = vld [vmem:[%s265 + $0x618] sm:$0xff]
      %v485 = vld [vmem:[%s265 + $0x620] sm:$0xff]
      %v486 = vld [vmem:[%s265 + $0x628] sm:$0xff]
      %v487 = vld [vmem:[%s265 + $0x630] sm:$0xff]
      %v488 = vld [vmem:[%s265 + $0x638] sm:$0xff]
      %v489 = vld [vmem:[%s265 + $0x640] sm:$0xff]
      %v490 = vld [vmem:[%s265 + $0x648] sm:$0xff]
      %v491 = vld [vmem:[%s265 + $0x650] sm:$0xff]
      %v492 = vld [vmem:[%s265 + $0x658] sm:$0xff]
      %v493 = vld [vmem:[%s265 + $0x660] sm:$0xff]
      %v494 = vld [vmem:[%s265 + $0x668] sm:$0xff]
      %v495 = vld [vmem:[%s265 + $0x670] sm:$0xff]
      %v496 = vld [vmem:[%s265 + $0x678] sm:$0xff]
      %v497 = vld [vmem:[%s265 + $0x680] sm:$0xff]
      %v498 = vld [vmem:[%s265 + $0x688] sm:$0xff]
      %v499 = vld [vmem:[%s265 + $0x690] sm:$0xff]
      %v500 = vld [vmem:[%s265 + $0x698] sm:$0xff]
      %v501 = vld [vmem:[%s265 + $0x6a0] sm:$0xff]
      %v502 = vld [vmem:[%s265 + $0x6a8] sm:$0xff]
      %v503 = vld [vmem:[%s265 + $0x6b0] sm:$0xff]
      %v504 = vld [vmem:[%s265 + $0x6b8] sm:$0xff]
      %v505 = vld [vmem:[%s265 + $0x6c0] sm:$0xff]
      %v506 = vld [vmem:[%s265 + $0x6c8] sm:$0xff]
      %v507 = vld [vmem:[%s265 + $0x6d0] sm:$0xff]
      %v508 = vld [vmem:[%s265 + $0x6d8] sm:$0xff]
      %v509 = vld [vmem:[%s265 + $0x6e0] sm:$0xff]
      %v510 = vld [vmem:[%s265 + $0x6e8] sm:$0xff]
      %v511 = vld [vmem:[%s265 + $0x6f0] sm:$0xff]
      %v512 = vld [vmem:[%s265 + $0x6f8] sm:$0xff]
      %v513 = vld [vmem:[%s265 + $0x700] sm:$0xff]
      %v514 = vld [vmem:[%s265 + $0x708] sm:$0xff]
      %v515 = vld [vmem:[%s265 + $0x710] sm:$0xff]
      %v516 = vld [vmem:[%s265 + $0x718] sm:$0xff]
      %v517 = vld [vmem:[%s265 + $0x720] sm:$0xff]
      %v518 = vld [vmem:[%s265 + $0x728] sm:$0xff]
      %v519 = vld [vmem:[%s265 + $0x730] sm:$0xff]
      %v520 = vld [vmem:[%s265 + $0x738] sm:$0xff]
      %v521 = vld [vmem:[%s265 + $0x740] sm:$0xff]
      %v522 = vld [vmem:[%s265 + $0x748] sm:$0xff]
      %v523 = vld [vmem:[%s265 + $0x750] sm:$0xff]
      %v524 = vld [vmem:[%s265 + $0x758] sm:$0xff]
      %v525 = vld [vmem:[%s265 + $0x760] sm:$0xff]
      %v526 = vld [vmem:[%s265 + $0x768] sm:$0xff]
      %v527 = vld [vmem:[%s265 + $0x770] sm:$0xff]
      %v528 = vld [vmem:[%s265 + $0x778] sm:$0xff]
      %v529 = vld [vmem:[%s265 + $0x780] sm:$0xff]
      %v530 = vld [vmem:[%s265 + $0x788] sm:$0xff]
      %v531 = vld [vmem:[%s265 + $0x790] sm:$0xff]
      %v532 = vld [vmem:[%s265 + $0x798] sm:$0xff]
      %v533 = vld [vmem:[%s265 + $0x7a0] sm:$0xff]
      %v534 = vld [vmem:[%s265 + $0x7a8] sm:$0xff]
      %v535 = vld [vmem:[%s265 + $0x7b0] sm:$0xff]
      %v536 = vld [vmem:[%s265 + $0x7b8] sm:$0xff]
      %v537 = vld [vmem:[%s265 + $0x7c0] sm:$0xff]
      %v538 = vld [vmem:[%s265 + $0x7c8] sm:$0xff]
      %v539 = vld [vmem:[%s265 + $0x7d0] sm:$0xff]
      %v540 = vld [vmem:[%s265 + $0x7d8] sm:$0xff]
      %v541 = vld [vmem:[%s265 + $0x7e0] sm:$0xff]
      %v542 = vld [vmem:[%s265 + $0x7e8] sm:$0xff]
      %v543 = vld [vmem:[%s265 + $0x7f0] sm:$0xff]
      %v544 = vld [vmem:[%s265 + $0x7f8] sm:$0xff]
      %v545 = vpack.c.bf16 %v297, %v289
      %v546 = vpack.c.bf16 %v298, %v290
      %v547 = vpack.c.bf16 %v299, %v291
      %v548 = vpack.c.bf16 %v300, %v292
      %v549 = vpack.c.bf16 %v301, %v293
      %v550 = vpack.c.bf16 %v302, %v294
      %v551 = vpack.c.bf16 %v303, %v295
      %v552 = vpack.c.bf16 %v304, %v296
      %v553 = vpack.c.bf16 %v313, %v305
      %v554 = vpack.c.bf16 %v314, %v306
      %v555 = vpack.c.bf16 %v315, %v307
      %v556 = vpack.c.bf16 %v316, %v308
      %v557 = vpack.c.bf16 %v317, %v309
      %v558 = vpack.c.bf16 %v318, %v310
      %v559 = vpack.c.bf16 %v319, %v311
      %v560 = vpack.c.bf16 %v320, %v312
      %v561 = vpack.c.bf16 %v329, %v321
      %v562 = vpack.c.bf16 %v330, %v322
      %v563 = vpack.c.bf16 %v331, %v323
      %v564 = vpack.c.bf16 %v332, %v324
      %v565 = vpack.c.bf16 %v333, %v325
      %v566 = vpack.c.bf16 %v334, %v326
      %v567 = vpack.c.bf16 %v335, %v327
      %v568 = vpack.c.bf16 %v336, %v328
      %v569 = vpack.c.bf16 %v345, %v337
      %v570 = vpack.c.bf16 %v346, %v338
      %v571 = vpack.c.bf16 %v347, %v339
      %v572 = vpack.c.bf16 %v348, %v340
      %v573 = vpack.c.bf16 %v349, %v341
      %v574 = vpack.c.bf16 %v350, %v342
      %v575 = vpack.c.bf16 %v351, %v343
      %v576 = vpack.c.bf16 %v352, %v344
      %v577 = vpack.c.bf16 %v361, %v353
      %v578 = vpack.c.bf16 %v362, %v354
      %v579 = vpack.c.bf16 %v363, %v355
      %v580 = vpack.c.bf16 %v364, %v356
      %v581 = vpack.c.bf16 %v365, %v357
      %v582 = vpack.c.bf16 %v366, %v358
      %v583 = vpack.c.bf16 %v367, %v359
      %v584 = vpack.c.bf16 %v368, %v360
      %v585 = vpack.c.bf16 %v377, %v369
      %v586 = vpack.c.bf16 %v378, %v370
      %v587 = vpack.c.bf16 %v379, %v371
      %v588 = vpack.c.bf16 %v380, %v372
      %v589 = vpack.c.bf16 %v381, %v373
      %v590 = vpack.c.bf16 %v382, %v374
      %v591 = vpack.c.bf16 %v383, %v375
      %v592 = vpack.c.bf16 %v384, %v376
      %v593 = vpack.c.bf16 %v393, %v385
      %v594 = vpack.c.bf16 %v394, %v386
      %v595 = vpack.c.bf16 %v395, %v387
      %v596 = vpack.c.bf16 %v396, %v388
      %v597 = vpack.c.bf16 %v397, %v389
      %v598 = vpack.c.bf16 %v398, %v390
      %v599 = vpack.c.bf16 %v399, %v391
      %v600 = vpack.c.bf16 %v400, %v392
      %v601 = vpack.c.bf16 %v409, %v401
      %v602 = vpack.c.bf16 %v410, %v402
      %v603 = vpack.c.bf16 %v411, %v403
      %v604 = vpack.c.bf16 %v412, %v404
      %v605 = vpack.c.bf16 %v413, %v405
      %v606 = vpack.c.bf16 %v414, %v406
      %v607 = vpack.c.bf16 %v415, %v407
      %v608 = vpack.c.bf16 %v416, %v408
      %v609 = vpack.c.bf16 %v425, %v417
      %v610 = vpack.c.bf16 %v426, %v418
      %v611 = vpack.c.bf16 %v427, %v419
      %v612 = vpack.c.bf16 %v428, %v420
      %v613 = vpack.c.bf16 %v429, %v421
      %v614 = vpack.c.bf16 %v430, %v422
      %v615 = vpack.c.bf16 %v431, %v423
      %v616 = vpack.c.bf16 %v432, %v424
      %v617 = vpack.c.bf16 %v441, %v433
      %v618 = vpack.c.bf16 %v442, %v434
      %v619 = vpack.c.bf16 %v443, %v435
      %v620 = vpack.c.bf16 %v444, %v436
      %v621 = vpack.c.bf16 %v445, %v437
      %v622 = vpack.c.bf16 %v446, %v438
      %v623 = vpack.c.bf16 %v447, %v439
      %v624 = vpack.c.bf16 %v448, %v440
      %v625 = vpack.c.bf16 %v457, %v449
      %v626 = vpack.c.bf16 %v458, %v450
      %v627 = vpack.c.bf16 %v459, %v451
      %v628 = vpack.c.bf16 %v460, %v452
      %v629 = vpack.c.bf16 %v461, %v453
      %v630 = vpack.c.bf16 %v462, %v454
      %v631 = vpack.c.bf16 %v463, %v455
      %v632 = vpack.c.bf16 %v464, %v456
      %v633 = vpack.c.bf16 %v473, %v465
      %v634 = vpack.c.bf16 %v474, %v466
      %v635 = vpack.c.bf16 %v475, %v467
      %v636 = vpack.c.bf16 %v476, %v468
      %v637 = vpack.c.bf16 %v477, %v469
      %v638 = vpack.c.bf16 %v478, %v470
      %v639 = vpack.c.bf16 %v479, %v471
      %v640 = vpack.c.bf16 %v480, %v472
      %v641 = vpack.c.bf16 %v489, %v481
      %v642 = vpack.c.bf16 %v490, %v482
      %v643 = vpack.c.bf16 %v491, %v483
      %v644 = vpack.c.bf16 %v492, %v484
      %v645 = vpack.c.bf16 %v493, %v485
      %v646 = vpack.c.bf16 %v494, %v486
      %v647 = vpack.c.bf16 %v495, %v487
      %v648 = vpack.c.bf16 %v496, %v488
      %v649 = vpack.c.bf16 %v505, %v497
      %v650 = vpack.c.bf16 %v506, %v498
      %v651 = vpack.c.bf16 %v507, %v499
      %v652 = vpack.c.bf16 %v508, %v500
      %v653 = vpack.c.bf16 %v509, %v501
      %v654 = vpack.c.bf16 %v510, %v502
      %v655 = vpack.c.bf16 %v511, %v503
      %v656 = vpack.c.bf16 %v512, %v504
      %v657 = vpack.c.bf16 %v521, %v513
      %v658 = vpack.c.bf16 %v522, %v514
      %v659 = vpack.c.bf16 %v523, %v515
      %v660 = vpack.c.bf16 %v524, %v516
      %v661 = vpack.c.bf16 %v525, %v517
      %v662 = vpack.c.bf16 %v526, %v518
      %v663 = vpack.c.bf16 %v527, %v519
      %v664 = vpack.c.bf16 %v528, %v520
      %v665 = vpack.c.bf16 %v537, %v529
      %v666 = vpack.c.bf16 %v538, %v530
      %v667 = vpack.c.bf16 %v539, %v531
      %v668 = vpack.c.bf16 %v540, %v532
      %v669 = vpack.c.bf16 %v541, %v533
      %v670 = vpack.c.bf16 %v542, %v534
      %v671 = vpack.c.bf16 %v543, %v535
      %v672 = vpack.c.bf16 %v544, %v536
      %v673 = vld [vmem:[%s2] sm:$0x3]
      %v676 = vunpack.c.l.s4 1966171168
      %v677 = vunpack.c.0.s8 %v676
      %v678 = vlaneseq
      %v679 = vshrl.u32 %v678, 7
      %v680 = vsub.s32 %v677, %v679
      %v681 = vrot.slane %v673, %v680
      %v682 = vcombine.high %v681, %v681
      %v684 = vunpack.c.l.s4 1966171168
      %v685 = vunpack.c.0.s8 %v684
      %v686 = vlaneseq
      %v687 = vshrl.u32 %v686, 7
      %v688 = vsub.s32 %v685, %v687
      %v689 = vrot.slane %v681, %v688
      %v691 = vunpack.c.l.s4 1966171168
      %v692 = vunpack.c.0.s8 %v691
      %v693 = vlaneseq
      %v694 = vshrl.u32 %v693, 7
      %v695 = vsub.s32 %v692, %v694
      %v696 = vrot.slane %v682, %v695
      %699 = vmatprep.subr.bf16.mxu0 %v546
      %700 = vmatpush1.bf16.msra.mxu0 %v545
      %701 = vmatprep.subr.bf16.mxu0 %v554
      %702 = vmatpush1.bf16.msra.mxu0 %v553
      %703 = vmatprep.subr.bf16.mxu0 %v562
      %704 = vmatpush1.bf16.msra.mxu0 %v561
      %705 = vmatprep.subr.bf16.mxu0 %v570
      %706 = vmatpush1.bf16.msra.mxu0 %v569
      %707 = vmatprep.subr.bf16.mxu0 %v578
      %708 = vmatpush1.bf16.msra.mxu0 %v577
      %709 = vmatprep.subr.bf16.mxu0 %v586
      %710 = vmatpush1.bf16.msra.mxu0 %v585
      %711 = vmatprep.subr.bf16.mxu0 %v594
      %712 = vmatpush1.bf16.msra.mxu0 %v593
      %713 = vmatprep.subr.bf16.mxu0 %v602
      %714 = vmatpush1.bf16.msra.mxu0 %v601
      %715 = vmatprep.subr.bf16.mxu0 %v610
      %716 = vmatpush1.bf16.msra.mxu0 %v609
      %717 = vmatprep.subr.bf16.mxu0 %v618
      %718 = vmatpush1.bf16.msra.mxu0 %v617
      %719 = vmatprep.subr.bf16.mxu0 %v626
      %720 = vmatpush1.bf16.msra.mxu0 %v625
      %721 = vmatprep.subr.bf16.mxu0 %v634
      %722 = vmatpush1.bf16.msra.mxu0 %v633
      %723 = vmatprep.subr.bf16.mxu0 %v642
      %724 = vmatpush1.bf16.msra.mxu0 %v641
      %725 = vmatprep.subr.bf16.mxu0 %v650
      %726 = vmatpush1.bf16.msra.mxu0 %v649
      %727 = vmatprep.subr.bf16.mxu0 %v658
      %728 = vmatpush1.bf16.msra.mxu0 %v657
      %729 = vmatprep.subr.bf16.mxu0 %v666
      %730 = vmatpush1.bf16.msra.mxu0 %v665
      %731 = vmatprep.mubr.bf16.mxu0 %v696
      %732 = vmatmul.mubr.bf16.gmra.mrb[0].mxu0 %v689
      %v733 = vpop.f32.mrb[0].mxu0
      %v734 = vadd.f32 0.0, %v733
      %v735 = vpop.f32.mrb[0].mxu0
      %v736 = vadd.f32 0.0, %v735
      %v737 = vpop.f32.mrb[0].mxu0
      %v738 = vpop.f32.mrb[0].mxu0
      %739 = vdwg.mxu0
      %740 = vmatprep.subr.bf16.mxu0 %v548
      %741 = vmatpush1.bf16.msra.mxu0 %v547
      %742 = vmatprep.subr.bf16.mxu0 %v556
      %743 = vmatpush1.bf16.msra.mxu0 %v555
      %744 = vmatprep.subr.bf16.mxu0 %v564
      %745 = vmatpush1.bf16.msra.mxu0 %v563
      %746 = vmatprep.subr.bf16.mxu0 %v572
      %747 = vmatpush1.bf16.msra.mxu0 %v571
      %748 = vmatprep.subr.bf16.mxu0 %v580
      %749 = vmatpush1.bf16.msra.mxu0 %v579
      %750 = vmatprep.subr.bf16.mxu0 %v588
      %751 = vmatpush1.bf16.msra.mxu0 %v587
      %752 = vmatprep.subr.bf16.mxu0 %v596
      %753 = vmatpush1.bf16.msra.mxu0 %v595
      %754 = vmatprep.subr.bf16.mxu0 %v604
      %755 = vmatpush1.bf16.msra.mxu0 %v603
      %756 = vmatprep.subr.bf16.mxu0 %v612
      %757 = vmatpush1.bf16.msra.mxu0 %v611
      %758 = vmatprep.subr.bf16.mxu0 %v620
      %759 = vmatpush1.bf16.msra.mxu0 %v619
      %760 = vmatprep.subr.bf16.mxu0 %v628
      %761 = vmatpush1.bf16.msra.mxu0 %v627
      %762 = vmatprep.subr.bf16.mxu0 %v636
      %763 = vmatpush1.bf16.msra.mxu0 %v635
      %764 = vmatprep.subr.bf16.mxu0 %v644
      %765 = vmatpush1.bf16.msra.mxu0 %v643
      %766 = vmatprep.subr.bf16.mxu0 %v652
      %767 = vmatpush1.bf16.msra.mxu0 %v651
      %768 = vmatprep.subr.bf16.mxu0 %v660
      %769 = vmatpush1.bf16.msra.mxu0 %v659
      %770 = vmatprep.subr.bf16.mxu0 %v668
      %771 = vmatpush1.bf16.msra.mxu0 %v667
      %772 = vmatprep.mubr.bf16.mxu0 %v696
      %773 = vmatmul.mubr.bf16.gmra.mrb[0].mxu0 %v689
      %v774 = vpop.f32.mrb[0].mxu0
      %v775 = vadd.f32 0.0, %v774
      %v776 = vpop.f32.mrb[0].mxu0
      %v777 = vadd.f32 0.0, %v776
      %v778 = vpop.f32.mrb[0].mxu0
      %v779 = vpop.f32.mrb[0].mxu0
      %780 = vdwg.mxu0
      %781 = vmatprep.subr.bf16.mxu0 %v550
      %782 = vmatpush1.bf16.msra.mxu0 %v549
      %783 = vmatprep.subr.bf16.mxu0 %v558
      %784 = vmatpush1.bf16.msra.mxu0 %v557
      %785 = vmatprep.subr.bf16.mxu0 %v566
      %786 = vmatpush1.bf16.msra.mxu0 %v565
      %787 = vmatprep.subr.bf16.mxu0 %v574
      %788 = vmatpush1.bf16.msra.mxu0 %v573
      %789 = vmatprep.subr.bf16.mxu0 %v582
      %790 = vmatpush1.bf16.msra.mxu0 %v581
      %791 = vmatprep.subr.bf16.mxu0 %v590
      %792 = vmatpush1.bf16.msra.mxu0 %v589
      %793 = vmatprep.subr.bf16.mxu0 %v598
      %794 = vmatpush1.bf16.msra.mxu0 %v597
      %795 = vmatprep.subr.bf16.mxu0 %v606
      %796 = vmatpush1.bf16.msra.mxu0 %v605
      %797 = vmatprep.subr.bf16.mxu0 %v614
      %798 = vmatpush1.bf16.msra.mxu0 %v613
      %799 = vmatprep.subr.bf16.mxu0 %v622
      %800 = vmatpush1.bf16.msra.mxu0 %v621
      %801 = vmatprep.subr.bf16.mxu0 %v630
      %802 = vmatpush1.bf16.msra.mxu0 %v629
      %803 = vmatprep.subr.bf16.mxu0 %v638
      %804 = vmatpush1.bf16.msra.mxu0 %v637
      %805 = vmatprep.subr.bf16.mxu0 %v646
      %806 = vmatpush1.bf16.msra.mxu0 %v645
      %807 = vmatprep.subr.bf16.mxu0 %v654
      %808 = vmatpush1.bf16.msra.mxu0 %v653
      %809 = vmatprep.subr.bf16.mxu0 %v662
      %810 = vmatpush1.bf16.msra.mxu0 %v661
      %811 = vmatprep.subr.bf16.mxu0 %v670
      %812 = vmatpush1.bf16.msra.mxu0 %v669
      %813 = vmatprep.mubr.bf16.mxu0 %v696
      %814 = vmatmul.mubr.bf16.gmra.mrb[0].mxu0 %v689
      %v815 = vpop.f32.mrb[0].mxu0
      %v816 = vadd.f32 0.0, %v815
      %v817 = vpop.f32.mrb[0].mxu0
      %v818 = vadd.f32 0.0, %v817
      %v819 = vpop.f32.mrb[0].mxu0
      %v820 = vpop.f32.mrb[0].mxu0
      %821 = vdwg.mxu0
      %822 = vmatprep.subr.bf16.mxu0 %v552
      %823 = vmatpush1.bf16.msra.mxu0 %v551
      %824 = vmatprep.subr.bf16.mxu0 %v560
      %825 = vmatpush1.bf16.msra.mxu0 %v559
      %826 = vmatprep.subr.bf16.mxu0 %v568
      %827 = vmatpush1.bf16.msra.mxu0 %v567
      %828 = vmatprep.subr.bf16.mxu0 %v576
      %829 = vmatpush1.bf16.msra.mxu0 %v575
      %830 = vmatprep.subr.bf16.mxu0 %v584
      %831 = vmatpush1.bf16.msra.mxu0 %v583
      %832 = vmatprep.subr.bf16.mxu0 %v592
      %833 = vmatpush1.bf16.msra.mxu0 %v591
      %834 = vmatprep.subr.bf16.mxu0 %v600
      %835 = vmatpush1.bf16.msra.mxu0 %v599
      %836 = vmatprep.subr.bf16.mxu0 %v608
      %837 = vmatpush1.bf16.msra.mxu0 %v607
      %838 = vmatprep.subr.bf16.mxu0 %v616
      %839 = vmatpush1.bf16.msra.mxu0 %v615
      %840 = vmatprep.subr.bf16.mxu0 %v624
      %841 = vmatpush1.bf16.msra.mxu0 %v623
      %842 = vmatprep.subr.bf16.mxu0 %v632
      %843 = vmatpush1.bf16.msra.mxu0 %v631
      %844 = vmatprep.subr.bf16.mxu0 %v640
      %845 = vmatpush1.bf16.msra.mxu0 %v639
      %846 = vmatprep.subr.bf16.mxu0 %v648
      %847 = vmatpush1.bf16.msra.mxu0 %v647
      %848 = vmatprep.subr.bf16.mxu0 %v656
      %849 = vmatpush1.bf16.msra.mxu0 %v655
      %850 = vmatprep.subr.bf16.mxu0 %v664
      %851 = vmatpush1.bf16.msra.mxu0 %v663
      %852 = vmatprep.subr.bf16.mxu0 %v672
      %853 = vmatpush1.bf16.msra.mxu0 %v671
      %854 = vmatprep.mubr.bf16.mxu0 %v696
      %855 = vmatmul.mubr.bf16.gmra.mrb[0].mxu0 %v689
      %v856 = vpop.f32.mrb[0].mxu0
      %v857 = vadd.f32 0.0, %v856
      %v858 = vpop.f32.mrb[0].mxu0
      %v859 = vadd.f32 0.0, %v858
      %v860 = vpop.f32.mrb[0].mxu0
      %v861 = vpop.f32.mrb[0].mxu0
      %862 = vdwg.mxu0
      %863 = vst [vmem:[#allocation3] sm:$0x1] %v734
      %864 = vst [vmem:[#allocation3 + $0x1] sm:$0x1] %v736
      %865 = vst [vmem:[#allocation3 + $0x2] sm:$0x1] %v775
      %866 = vst [vmem:[#allocation3 + $0x3] sm:$0x1] %v777
      %867 = vst [vmem:[#allocation3 + $0x4] sm:$0x1] %v816
      %868 = vst [vmem:[#allocation3 + $0x5] sm:$0x1] %v818
      %869 = vst [vmem:[#allocation3 + $0x6] sm:$0x1] %v857
      %870 = vst [vmem:[#allocation3 + $0x7] sm:$0x1] %v859
      %v871 = vld [vmem:[#allocation3] sm:$0xff]
      %s872 = sld [smem:[#allocation4]]
      %v873 = vstv %s872
      %v874 = vadd.f32 %v871, %v873
      %v875 = vsub.f32 0.0, %v874
      %v876 = vmul.f32 %v875, 1.442695
      %v877 = vpow.pop %v876
      %v878 = vadd.f32 %v877, 1.0
      %v879 = vrcp.pop %v878
      %v880 = vld [vmem:[%s276] sm:$0xff]
      %v881 = vsub.f32 %v879, %v880
      %v882 = vmul.f32 %v881, %v881
      %s883 = sadd.s32 %s22, %s23
      %s884 = smul.u32 %s883, 1024
      %v885 = vlaneseq
      %v886 = vshrl.u32 %v885, 7
      %v887 = vlaneseq
      %v888 = vand.u32 %v887, 127
      %v889 = vmul.u32 %v886, 128
      %v890 = vstv %s884
      %v891 = vadd.s32 %v890, %v889
      %v892 = vadd.s32 %v891, %v888
      %vm893 = vcmp.lt.s32.totalorder %v892, 256
      %v894 = vsel %vm893, %v882, 0.0
      %v895 = vld [vmem:[#allocation2] sm:$0xff]
      %v896 = vadd.f32 %v895, %v894
      %897 = vst [vmem:[#allocation2] sm:$0xff] %v896
      // Predicated region
      $region41: #{salience_map_mse.1} parent=35 // pred_check
        %p898 = pneg %p284
      $region42: #{salience_map_mse.1} parent=35 // pred_check_branch
        %900 = sbr.rel (%p898) target = $region44
      $region43: #{salience_map_mse.1} parent=35 // pred_region
        %v901 = vld [vmem:[#allocation2] sm:$0xff]
        %902 = vadd.xlane.f32.xlu0 %v901
        %v903 = vpop.xlane.xlu0 %902
        %v904 = vrot.slane %v903, 4
        %v905 = vadd.f32 %v903, %v904
        %v906 = vrot.slane %v905, 2
        %v907 = vadd.f32 %v905, %v906
        %v908 = vrot.slane %v907, 1
        %v909 = vadd.f32 %v907, %v908
        %s910 = vtos %v909
        %v911 = vstv %s910
        %912 = vst [vmem:[%s282] sm:$0xff] %v911
      $region44: #{salience_map_mse.1} parent=35 // pred_fallthru
        _
      %s913 = sadd.s32 %s21, %s22
      %p914 = scmp.lt.s32.totalorder %s913, 1
      %s915 = scalar_select %p914, %s913, 1
      %s916 = smul.addr %s915, 8
      %s917 = scalar_lea.vmem %s4, %s916
      // Predicated region
      $region45: #{salience_map_mse.1} parent=35 // pred_check
        %p918 = pneg %p157
      $region46: #{salience_map_mse.1} parent=35 // pred_check_branch
        %920 = sbr.rel (%p918) target = $region48
      $region47: #{salience_map_mse.1} parent=35 // pred_region
        %s921 = sadd.s32 %s21, %s22
      $region48: #{salience_map_mse.1} parent=35 // pred_fallthru
        _
    $region36: #{salience_map_mse.1} parent=5 // pred_fallthru
      _
    %p922 = scmp.le.s32.totalorder 2, %s11
    // Predicated region
    $region49: #{salience_map_mse.1} parent=5 // pred_check
      %p923 = pneg %p922
    $region50: #{salience_map_mse.1} parent=5 // pred_check_branch
      %925 = sbr.rel (%p923) target = $region52
    $region51: #{salience_map_mse.1} parent=5 // pred_region
      %s926 = ssub.s32 %s11, 2
      // Predicated region
      $region53: #{salience_map_mse.1} parent=51 // pred_check
        %p927 = pneg %p163
      $region54: #{salience_map_mse.1} parent=51 // pred_check_branch
        %929 = sbr.rel (%p927) target = $region56
      $region55: #{salience_map_mse.1} parent=51 // pred_region
        %s930 = sadd.s32 %s24, %s25
        %p931 = scmp.lt.s32.totalorder %s930, 1
        %s932 = scalar_select %p931, %s930, 1
        %s933 = smul.addr %s932, 8
        %s934 = scalar_lea.vmem %s4, %s933
      $region56: #{salience_map_mse.1} parent=51 // pred_fallthru
        _
    $region52: #{salience_map_mse.1} parent=5 // pred_fallthru
      _
  $region6: #{salience_map_mse.1} parent=0 // loop_footer
    %s15 = sadd.s32 1, %s11
  $region7: #{salience_map_mse.1} parent=0 // loop_footer_branch
    %10 = sbr.rel target = $region3
  $region8: #{salience_map_mse.1} parent=0 // loop_exit
    _

</llo_original>
